<compile_context>
chip_gen: v7x
topology: tpu7x:2x2x1
jax: 0.10.0
libtpu: 0.0.40
codegen_flags: <defaults>
</compile_context>

<pallas_src>
import functools

import jax
import jax.numpy as jnp
from jax import lax
from jax.experimental import pallas as pl
from jax.experimental.pallas import tpu as pltpu

BN_EPS = 1e-5
LANE = 128
SUBLANE = 8


def _round_up(n, m):
    return ((n + m - 1) // m) * m


# ---------- pass 1: per-tile partial BN statistics of h = x @ W1^T + b1 ----------
def _stats_kernel(x_ref, w1_ref, b1_ref, stats_ref, *, n_true, tm):
    i = pl.program_id(0)
    x = x_ref[...]
    h = jnp.dot(x, w1_ref[...], preferred_element_type=jnp.float32) + b1_ref[...]
    # Mask rows past the true N (zero-padded x rows would otherwise contribute b1).
    row = i * tm + lax.broadcasted_iota(jnp.int32, (tm, 1), 0)
    hm = jnp.where(row < n_true, h, 0.0)
    s = jnp.sum(hm, axis=0, keepdims=True)        # (1, Fp)  per-feature sum
    ss = jnp.sum(hm * hm, axis=0, keepdims=True)  # (1, Fp)  per-feature sum of squares
    stats_ref[0] = jnp.concatenate([s, ss], axis=0)  # (2, Fp)


# ---------- pass 2: fused Linear1(+folded BN) -> ReLU -> Linear2 -> Sigmoid ------
def _fused_kernel(x_ref, w1_ref, b1_ref, w2_ref, b2_ref, o_ref):
    x = x_ref[...]
    h = jnp.dot(x, w1_ref[...], preferred_element_type=jnp.float32) + b1_ref[...]
    a = jnp.maximum(h, 0.0)
    z = jnp.dot(a, w2_ref[...], preferred_element_type=jnp.float32) + b2_ref[...]
    # Exact sigmoid (exp runs on the EUP).  pl.reciprocal(approx=True) would be
    # marginally faster but breaks exact-match tolerance with the reference.
    o_ref[...] = (1.0 / (1.0 + jnp.exp(-z))).astype(o_ref.dtype)


def prot_attn(x, w1, b1, gamma, beta, w2, b2):
    """x: (B, L, F) float32; w1/w2: PyTorch-layout (out_feats, in_feats) weights."""
    B, L, F = x.shape
    N = B * L
    f32 = jnp.float32

    # Lane-dense feature padding and 8-aligned row tiling.
    f_pad = _round_up(max(F, LANE), LANE)
    tm = max(SUBLANE, min(1024, _round_up(N, SUBLANE)))   # <= ~0.5 MiB/tile @ Fp=128
    n_pad = _round_up(N, tm)
    num_tiles = n_pad // tm

    # Glue: pad F -> f_pad (zeros), pad rows N -> n_pad (zeros), transpose weights
    # to (in, out) so the kernel does row-major x @ W.
    x_pad = jnp.zeros((n_pad, f_pad), f32).at[:N, :F].set(x.reshape(N, F).astype(f32))
    w1t = jnp.zeros((f_pad, f_pad), f32).at[:F, :F].set(jnp.asarray(w1, f32).T)
    w2t = jnp.zeros((f_pad, f_pad), f32).at[:F, :F].set(jnp.asarray(w2, f32).T)
    pad_row = lambda v: jnp.zeros((1, f_pad), f32).at[0, :F].set(jnp.asarray(v, f32))
    b1r, gammar, betar, b2r = pad_row(b1), pad_row(gamma), pad_row(beta), pad_row(b2)

    # ---------------- pass 1: partial (sum, sumsq) per row tile ----------------
    stats = pl.pallas_call(
        functools.partial(_stats_kernel, n_true=N, tm=tm),
        out_shape=jax.ShapeDtypeStruct((num_tiles, 2, f_pad), f32),
        grid=(num_tiles,),
        in_specs=[
            pl.BlockSpec((tm, f_pad), lambda i: (i, 0)),        # streamed x tiles
            pl.BlockSpec((f_pad, f_pad), lambda i: (0, 0)),     # W1^T resident
            pl.BlockSpec((1, f_pad), lambda i: (0, 0)),         # b1 resident
        ],
        out_specs=pl.BlockSpec((1, 2, f_pad), lambda i: (i, 0, 0)),
        compiler_params=pltpu.CompilerParams(dimension_semantics=("parallel",)),
    )(x_pad, w1t, b1r)

    # ---------- combine stats and fold BatchNorm into Linear1 (tiny JAX work) ----------
    sums = jnp.sum(stats[:, 0, :], axis=0)
    sumsqs = jnp.sum(stats[:, 1, :], axis=0)
    mean = sums / N
    var = jnp.maximum(sumsqs / N - mean * mean, 0.0)   # biased (training-mode) variance
    scale = gammar[0] * lax.rsqrt(var + BN_EPS)        # padded features: gamma=0 -> scale=0
    w1t_folded = w1t * scale[None, :]
    b1_folded = ((b1r[0] - mean) * scale + betar[0]).reshape(1, f_pad)

    # ---------------- pass 2: fused, row-parallel main pass ----------------
    out = pl.pallas_call(
        _fused_kernel,
        out_shape=jax.ShapeDtypeStruct((n_pad, f_pad), x.dtype),
        grid=(num_tiles,),
        in_specs=[
            pl.BlockSpec((tm, f_pad), lambda i: (i, 0)),        # streamed x tiles
            pl.BlockSpec((f_pad, f_pad), lambda i: (0, 0)),     # W1' resident
            pl.BlockSpec((1, f_pad), lambda i: (0, 0)),         # b1' resident
            pl.BlockSpec((f_pad, f_pad), lambda i: (0, 0)),     # W2^T resident
            pl.BlockSpec((1, f_pad), lambda i: (0, 0)),         # b2 resident
        ],
        out_specs=pl.BlockSpec((tm, f_pad), lambda i: (i, 0)),
        compiler_params=pltpu.CompilerParams(dimension_semantics=("parallel",)),
    )(x_pad, w1t_folded, b1_folded, w2t, b2r)

    return out[:N, :F].reshape(B, L, F)


def prot_attn_reference(x, w1, b1, gamma, beta, w2, b2):
    """Pure-JAX reference matching the PyTorch forward (train-mode BatchNorm)."""
    h = jnp.einsum("blf,gf->blg", x, w1) + b1             # Linear1
    mean = jnp.mean(h, axis=(0, 1), keepdims=True)        # BN over (B, L) per feature
    var = jnp.mean(jnp.square(h - mean), axis=(0, 1), keepdims=True)
    hn = (h - mean) / jnp.sqrt(var + BN_EPS) * gamma + beta
    a = jnp.maximum(hn, 0.0)                              # ReLU
    z = jnp.einsum("blf,gf->blg", a, w2) + b2             # Linear2
    return jax.nn.sigmoid(z)                              # Sigmoid


if __name__ == "__main__":
    B, L, F = 2, 8, 32  # batch, sequence length, in_feats

    key = jax.random.PRNGKey(0)
    kx, k1, k2, k3, k4 = jax.random.split(key, 5)

    x = jax.random.normal(kx, (B, L, F), dtype=jnp.float32)

    # Deterministic parameter init (PyTorch Linear layout: (out_feats, in_feats)).
    bound = 1.0 / jnp.sqrt(F)
    w1 = jax.random.uniform(k1, (F, F), minval=-bound, maxval=bound, dtype=jnp.float32)
    b1 = jax.random.uniform(k2, (F,), minval=-bound, maxval=bound, dtype=jnp.float32)
    w2 = jax.random.uniform(k3, (F, F), minval=-bound, maxval=bound, dtype=jnp.float32)
    b2 = jax.random.uniform(k4, (F,), minval=-bound, maxval=bound, dtype=jnp.float32)
    gamma = jnp.ones((F,), dtype=jnp.float32)   # BatchNorm1d weight init
    beta = jnp.zeros((F,), dtype=jnp.float32)   # BatchNorm1d bias init

    out = prot_attn(x, w1, b1, gamma, beta, w2, b2)
    out = jax.block_until_ready(out)

    ref = prot_attn_reference(x, w1, b1, gamma, beta, w2, b2)
    assert out.shape == (B, L, F)
    # Slightly relaxed tolerance: BN-folding and one-pass sum/sumsq variance
    # reassociate a handful of f32 ops relative to the reference ordering.
    assert jnp.allclose(out, ref, atol=1e-4, rtol=1e-4), "mismatch vs reference"

    print("KERNEL_OK")
</pallas_src>

<mosaic_0001>
module attributes {stable_mosaic.version = 11 : i64} {
  func.func @_stats_kernel(%arg0: i32, %arg1: memref<16x128xf32, #tpu.memory_space<vmem>>, %arg2: memref<128x128xf32, #tpu.memory_space<vmem>>, %arg3: memref<1x128xf32, #tpu.memory_space<vmem>>, %arg4: memref<1x2x128xf32, #tpu.memory_space<vmem>>) attributes {dimension_semantics = [#tpu.dimension_semantics<parallel>], iteration_bounds = array<i64: 1>, scalar_prefetch = 0 : i64, scratch_operands = 0 : i64, tpu.core_type = #tpu.core_type<tc>, window_params = [{transform_indices = @transform_0, window_bounds = array<i64: 16, 128>}, {pipeline_mode = #tpu.pipeline_mode<synchronous>, transform_indices = @transform_1, window_bounds = array<i64: 128, 128>}, {pipeline_mode = #tpu.pipeline_mode<synchronous>, transform_indices = @transform_2, window_bounds = array<i64: 1, 128>}, {transform_indices = @transform_3, window_bounds = array<i64: 1, 2, 128>}]} {
    %c0 = arith.constant 0 : index
    %c0_0 = arith.constant 0 : index
    %0 = vector.load %arg1[%c0, %c0_0] : memref<16x128xf32, #tpu.memory_space<vmem>>, vector<16x128xf32>
    %c0_1 = arith.constant 0 : index
    %c0_2 = arith.constant 0 : index
    %1 = vector.load %arg2[%c0_1, %c0_2] : memref<128x128xf32, #tpu.memory_space<vmem>>, vector<128x128xf32>
    %cst = arith.constant dense<0.000000e+00> : vector<16x128xf32>
    %2 = tpu.matmul %0, %1, %cst {dimension_numbers = #tpu.dot_dimension_numbers<[1], [0], [0], [1], [0, 0, 1, 1], [], []>} : vector<16x128xf32>, vector<128x128xf32>, vector<16x128xf32> -> vector<16x128xf32>
    %c0_3 = arith.constant 0 : index
    %c0_4 = arith.constant 0 : index
    %3 = vector.load %arg3[%c0_3, %c0_4] : memref<1x128xf32, #tpu.memory_space<vmem>>, vector<1x128xf32>
    %4 = vector.broadcast %3 : vector<1x128xf32> to vector<16x128xf32>
    %5 = arith.addf %2, %4 : vector<16x128xf32>
    %c16_i32 = arith.constant 16 : i32
    %6 = arith.muli %arg0, %c16_i32 : i32
    %7 = tpu.iota {dimensions = array<i32: 0>} : vector<16x1xi32>
    %8 = vector.broadcast %6 : i32 to vector<16x1xi32>
    %9 = arith.addi %8, %7 : vector<16x1xi32>
    %c16_i32_5 = arith.constant 16 : i32
    %10 = vector.broadcast %c16_i32_5 : i32 to vector<16x1xi32>
    %11 = arith.cmpi slt, %9, %10 : vector<16x1xi32>
    %cst_6 = arith.constant 0.000000e+00 : f32
    %12 = vector.shape_cast %11 : vector<16x1xi1> to vector<16x1xi1>
    %13 = vector.broadcast %12 : vector<16x1xi1> to vector<16x128xi1>
    %14 = vector.broadcast %cst_6 : f32 to vector<16x128xf32>
    %15 = arith.select %13, %5, %14 : vector<16x128xi1>, vector<16x128xf32>
    %cst_7 = arith.constant dense<0.000000e+00> : vector<128xf32>
    %16 = vector.multi_reduction <add>, %15, %cst_7 [0] : vector<16x128xf32> to vector<128xf32>
    %17 = vector.shape_cast %16 : vector<128xf32> to vector<1x128xf32>
    %18 = arith.mulf %15, %15 : vector<16x128xf32>
    %cst_8 = arith.constant dense<0.000000e+00> : vector<128xf32>
    %19 = vector.multi_reduction <add>, %18, %cst_8 [0] : vector<16x128xf32> to vector<128xf32>
    %20 = vector.shape_cast %19 : vector<128xf32> to vector<1x128xf32>
    %21 = tpu.concatenate %17, %20 in 0 : vector<1x128xf32>, vector<1x128xf32> -> vector<2x128xf32>
    %c0_9 = arith.constant 0 : index
    %c0_10 = arith.constant 0 : index
    %c0_11 = arith.constant 0 : index
    %22 = vector.load %arg4[%c0_9, %c0_10, %c0_11] : memref<1x2x128xf32, #tpu.memory_space<vmem>>, vector<1x2x128xf32>
    %23 = vector.shape_cast %22 : vector<1x2x128xf32> to vector<2x128xf32>
    %24 = vector.shape_cast %21 : vector<2x128xf32> to vector<1x2x128xf32>
    tpu.vector_store %arg4[%c0_9, %c0_10, %c0_11], %24 {strides = array<i32>} : memref<1x2x128xf32, #tpu.memory_space<vmem>>, vector<1x2x128xf32>,
    return
  }
  func.func @transform_0(%arg0: i32) -> (i32, i32) {
    %c0_i32 = arith.constant 0 : i32
    %c0_i32_0 = arith.constant 0 : i32
    return %arg0, %c0_i32 : i32, i32
  }
  func.func @transform_1(%arg0: i32) -> (i32, i32) {
    %c0_i32 = arith.constant 0 : i32
    %c0_i32_0 = arith.constant 0 : i32
    %c0_i32_1 = arith.constant 0 : i32
    return %c0_i32, %c0_i32_0 : i32, i32
  }
  func.func @transform_2(%arg0: i32) -> (i32, i32) {
    %c0_i32 = arith.constant 0 : i32
    %c0_i32_0 = arith.constant 0 : i32
    %c0_i32_1 = arith.constant 0 : i32
    return %c0_i32, %c0_i32_0 : i32, i32
  }
  func.func @transform_3(%arg0: i32) -> (i32, i32, i32) {
    %c0_i32 = arith.constant 0 : i32
    %c0_i32_0 = arith.constant 0 : i32
    %c0_i32_1 = arith.constant 0 : i32
    return %arg0, %c0_i32, %c0_i32_0 : i32, i32, i32
  }
}

</mosaic_0001>

<llo_original>
// kernel: tpu_custom_call.1
$region0: #{tpu_custom_call.1}
  #allocation0 [shape = 'u32[]', space=smem, size = 0x4, offset = 0x4, fixed_abs, tag = 'smem constant byte address 0x4 - core index']
  #allocation1 [shape = 'u32[144,128]{1,0:T(1,128)}', space=vmem, size = 0x12000, scoped, tag = 'internal scratch']
  %s0 = inlined_call_operand.hbm [shape: f32[16,128], index: 0, kind: input, shape index: {}]
  %s1 = inlined_call_operand.hbm [shape: f32[128,128], index: 1, kind: input, shape index: {}]
  %s2 = inlined_call_operand.vmem [shape: f32[1,128], index: 2, kind: input, shape index: {}]
  %s3 = inlined_call_operand.hbm [shape: f32[1,2,128], index: 3, kind: output, shape index: {}]
  %s4 = sld [smem:[#allocation0]]
  $region30: #{tpu_custom_call.1} parent=0
    _
  %s6 = ssub.s32 1, %s4
  %s7 = scalar_select 0, %s6, %s4
  $region1: #{tpu_custom_call.1} parent=0
    #allocation2 [shape = 'u8[8192]{0}', space=vmem, size = 0x2000, scoped, tag = 'input window, operand 0, single buffered']
    #allocation3 [shape = 's32[1]{0}', space=sflag, size = 0x4, scoped, tag = 'scoped memory for tpu_custom_call.1']
    #allocation4 [shape = 's32[1]{0}', space=sflag, size = 0x4, scoped, tag = 'scoped memory for tpu_custom_call.1']
    #allocation5 [shape = 'u8[65536]{0}', space=vmem, size = 0x10000, scoped, tag = 'input window, operand 1, single buffered']
    #allocation6 [shape = 's32[1]{0}', space=sflag, size = 0x4, scoped, tag = 'scoped memory for tpu_custom_call.1']
    #allocation7 [shape = 'u8[1024]{0}', space=vmem, size = 0x400, scoped, tag = 'output window, operand 0, single buffered']
    %8 = vsyncpa [#allocation3], 0
    %9 = vsyncpa [#allocation6], 0
    %10 = vsyncpa [#allocation4], 0
    // Predicated region
    $region2: #{tpu_custom_call.1} parent=1 // pred_check
      _
    $region3: #{tpu_custom_call.1} parent=1 // pred_check_branch
      %12 = sbr.rel (0) target = $region5
    $region4: #{tpu_custom_call.1} parent=1 // pred_region
      %s14 = ssub.s32 256, 256
      %15 = vsyncadd [#allocation3], %s14
      %s16 = sshll.u32 [#allocation2], 4
      %s17 = int_to_ptr.vmem [resolvable:$true] %s16
      %22 = dma.hbm_to_vmem [thread:$0]  %s0, 256, %s17, [#allocation3], 128, 128, 8
    $region5: #{tpu_custom_call.1} parent=1 // pred_fallthru
      _
    // Predicated region
    $region6: #{tpu_custom_call.1} parent=1 // pred_check
      _
    $region7: #{tpu_custom_call.1} parent=1 // pred_check_branch
      %24 = sbr.rel (0) target = $region9
    $region8: #{tpu_custom_call.1} parent=1 // pred_region
      %s26 = ssub.s32 2048, 2048
      %27 = vsyncadd [#allocation6], %s26
      %s28 = sshll.u32 [#allocation5], 4
      %s29 = int_to_ptr.vmem [resolvable:$true] %s28
      %34 = dma.hbm_to_vmem [thread:$0]  %s1, 2048, %s29, [#allocation6], 128, 128, 8
    $region9: #{tpu_custom_call.1} parent=1 // pred_fallthru
      _
    // Predicated region
    $region10: #{tpu_custom_call.1} parent=1 // pred_check
      _
    $region11: #{tpu_custom_call.1} parent=1 // pred_check_branch
      %36 = sbr.rel (0) target = $region13
    $region12: #{tpu_custom_call.1} parent=1 // pred_region
      _
    $region13: #{tpu_custom_call.1} parent=1 // pred_fallthru
      _
    // Predicated region
    $region14: #{tpu_custom_call.1} parent=1 // pred_check
      _
    $region15: #{tpu_custom_call.1} parent=1 // pred_check_branch
      %38 = sbr.rel (0) target = $region17
    $region16: #{tpu_custom_call.1} parent=1 // pred_region
      %39 = dma.done [#allocation3], 256
    $region17: #{tpu_custom_call.1} parent=1 // pred_fallthru
      _
    // Predicated region
    $region18: #{tpu_custom_call.1} parent=1 // pred_check
      _
    $region19: #{tpu_custom_call.1} parent=1 // pred_check_branch
      %41 = sbr.rel (0) target = $region21
    $region20: #{tpu_custom_call.1} parent=1 // pred_region
      %42 = dma.done [#allocation6], 2048
    $region21: #{tpu_custom_call.1} parent=1 // pred_fallthru
      _
    %v43 = vld [vmem:[#allocation2] sm:$0xff]
    %v44 = vld [vmem:[#allocation2 + $0x8] sm:$0xff]
    %v45 = vld [vmem:[#allocation5] sm:$0xff]
    %v46 = vld [vmem:[#allocation5 + $0x8] sm:$0xff]
    %v47 = vld [vmem:[#allocation5 + $0x10] sm:$0xff]
    %v48 = vld [vmem:[#allocation5 + $0x18] sm:$0xff]
    %v49 = vld [vmem:[#allocation5 + $0x20] sm:$0xff]
    %v50 = vld [vmem:[#allocation5 + $0x28] sm:$0xff]
    %v51 = vld [vmem:[#allocation5 + $0x30] sm:$0xff]
    %v52 = vld [vmem:[#allocation5 + $0x38] sm:$0xff]
    %v53 = vld [vmem:[#allocation5 + $0x40] sm:$0xff]
    %v54 = vld [vmem:[#allocation5 + $0x48] sm:$0xff]
    %v55 = vld [vmem:[#allocation5 + $0x50] sm:$0xff]
    %v56 = vld [vmem:[#allocation5 + $0x58] sm:$0xff]
    %v57 = vld [vmem:[#allocation5 + $0x60] sm:$0xff]
    %v58 = vld [vmem:[#allocation5 + $0x68] sm:$0xff]
    %v59 = vld [vmem:[#allocation5 + $0x70] sm:$0xff]
    %v60 = vld [vmem:[#allocation5 + $0x78] sm:$0xff]
    %v61 = vld [vmem:[%s2] sm:$0x1]
    %v63 = vlaneseq
    %v64 = vshrl.u32 %v63, 7
    %v65 = vsub.s32 0, %v64
    %v66 = vrot.slane %v61, %v65
    %68 = vmatprep.subr.mxu0 0.0
    %69 = vmatpush1.msra.mxu0 %v45
    %70 = vmatprep.subr.mxu0 0.0
    %71 = vmatpush1.msra.mxu0 %v46
    %72 = vmatprep.subr.mxu0 0.0
    %73 = vmatpush1.msra.mxu0 %v47
    %74 = vmatprep.subr.mxu0 0.0
    %75 = vmatpush1.msra.mxu0 %v48
    %76 = vmatprep.subr.mxu0 0.0
    %77 = vmatpush1.msra.mxu0 %v49
    %78 = vmatprep.subr.mxu0 0.0
    %79 = vmatpush1.msra.mxu0 %v50
    %80 = vmatprep.subr.mxu0 0.0
    %81 = vmatpush1.msra.mxu0 %v51
    %82 = vmatprep.subr.mxu0 0.0
    %83 = vmatpush1.msra.mxu0 %v52
    %84 = vmatprep.subr.mxu0 0.0
    %85 = vmatpush1.msra.mxu0 %v53
    %86 = vmatprep.subr.mxu0 0.0
    %87 = vmatpush1.msra.mxu0 %v54
    %88 = vmatprep.subr.mxu0 0.0
    %89 = vmatpush1.msra.mxu0 %v55
    %90 = vmatprep.subr.mxu0 0.0
    %91 = vmatpush1.msra.mxu0 %v56
    %92 = vmatprep.subr.mxu0 0.0
    %93 = vmatpush1.msra.mxu0 %v57
    %94 = vmatprep.subr.mxu0 0.0
    %95 = vmatpush1.msra.mxu0 %v58
    %96 = vmatprep.subr.mxu0 0.0
    %97 = vmatpush1.msra.mxu0 %v59
    %98 = vmatprep.subr.mxu0 0.0
    %99 = vmatpush1.msra.mxu0 %v60
    %100 = vmatprep.subr.mxu0 0.0
    %101 = vmatpush1.msra.mxu0 0.0
    %102 = vmatprep.subr.mxu0 0.0
    %103 = vmatpush1.msra.mxu0 0.0
    %104 = vmatprep.subr.mxu0 0.0
    %105 = vmatpush1.msra.mxu0 0.0
    %106 = vmatprep.subr.mxu0 0.0
    %107 = vmatpush1.msra.mxu0 0.0
    %108 = vmatprep.subr.mxu0 0.0
    %109 = vmatpush1.msra.mxu0 0.0
    %110 = vmatprep.subr.mxu0 0.0
    %111 = vmatpush1.msra.mxu0 0.0
    %112 = vmatprep.subr.mxu0 0.0
    %113 = vmatpush1.msra.mxu0 0.0
    %114 = vmatprep.subr.mxu0 0.0
    %115 = vmatpush1.msra.mxu0 0.0
    %116 = vmatprep.subr.mxu0 0.0
    %117 = vmatpush1.msra.mxu0 0.0
    %118 = vmatprep.subr.mxu0 0.0
    %119 = vmatpush1.msra.mxu0 0.0
    %120 = vmatprep.subr.mxu0 0.0
    %121 = vmatpush1.msra.mxu0 0.0
    %122 = vmatprep.subr.mxu0 0.0
    %123 = vmatpush1.msra.mxu0 0.0
    %124 = vmatprep.subr.mxu0 0.0
    %125 = vmatpush1.msra.mxu0 0.0
    %126 = vmatprep.subr.mxu0 0.0
    %127 = vmatpush1.msra.mxu0 0.0
    %128 = vmatprep.subr.mxu0 0.0
    %129 = vmatpush1.msra.mxu0 0.0
    %130 = vmatprep.subr.mxu0 0.0
    %131 = vmatpush1.msra.mxu0 0.0
    %132 = vmatprep.mubr.f32.mxu0 0.0
    %133 = vmatmul.mubr.f32.gmra.mrb[0].mxu0 %v43
    %v134 = vpop.f32.mrb[0].mxu0
    %v135 = vadd.f32 %v66, %v134
    %v136 = vpop.f32.mrb[0].mxu0
    %137 = vmatprep.mubr.f32.mxu0 0.0
    %138 = vmatmul.mubr.f32.gmra.mrb[0].mxu0 %v44
    %v139 = vpop.f32.mrb[0].mxu0
    %v140 = vadd.f32 %v66, %v139
    %v141 = vpop.f32.mrb[0].mxu0
    %142 = vdwg.mxu0
    %s143 = smul.u32 0, 16
    %v144 = vlaneseq
    %v145 = vshrl.u32 %v144, 7
    %v146 = vadd.s32 %v145, 8
    %v147 = vstv %s143
    %v148 = vadd.s32 %v147, %v145
    %v149 = vadd.s32 %v147, %v146
    %vm150 = vcmp.lt.s32.totalorder %v148, 16
    %vm151 = vcmp.lt.s32.totalorder %v149, 16
    %v152 = vsel %vm150, 1, 0
    %v153 = vsel %vm151, 1, 0
    %vm154 = vcmp.eq.s32.totalorder %v152, 1
    %vm155 = vcmp.eq.s32.totalorder %v153, 1
    %v156 = vsel %vm154, %v135, 0.0
    %v157 = vsel %vm155, %v140, 0.0
    %v158 = vadd.f32 %v156, %v157
    %v159 = vrot.slane %v158, 4
    %v160 = vadd.f32 %v158, %v159
    %v161 = vrot.slane %v160, 2
    %v162 = vadd.f32 %v160, %v161
    %v163 = vrot.slane %v162, 1
    %v164 = vadd.f32 %v162, %v163
    %v165 = vmul.f32 %v156, %v156
    %v166 = vmul.f32 %v157, %v157
    %v167 = vadd.f32 %v165, %v166
    %v168 = vrot.slane %v167, 4
    %v169 = vadd.f32 %v167, %v168
    %v170 = vrot.slane %v169, 2
    %v171 = vadd.f32 %v169, %v170
    %v172 = vrot.slane %v171, 1
    %v173 = vadd.f32 %v171, %v172
    %vm174 = vcmask 1040384
    %v175 = vsel %vm174, %v164, %v173
    %176 = vst [vmem:[#allocation7] sm:$0x3] %v175
    // Predicated region
    $region22: #{tpu_custom_call.1} parent=1 // pred_check
      _
    $region23: #{tpu_custom_call.1} parent=1 // pred_check_branch
      %178 = sbr.rel (0) target = $region25
    $region24: #{tpu_custom_call.1} parent=1 // pred_region
      %s180 = ssub.s32 32, 32
      %181 = vsyncadd [#allocation4], %s180
      %s183 = sshll.u32 [#allocation7], 4
      %s184 = int_to_ptr.vmem [resolvable:$true] %s183
      %186 = dma.vmem_to_hbm [thread:$0]  %s184, 32, %s3, [#allocation4]
    $region25: #{tpu_custom_call.1} parent=1 // pred_fallthru
      _
    // Predicated region
    $region26: #{tpu_custom_call.1} parent=1 // pred_check
      _
    $region27: #{tpu_custom_call.1} parent=1 // pred_check_branch
      %188 = sbr.rel (0) target = $region29
    $region28: #{tpu_custom_call.1} parent=1 // pred_region
      %189 = dma.done [#allocation4], 32
    $region29: #{tpu_custom_call.1} parent=1 // pred_fallthru
      _
    %190 = vsyncpa [#allocation3], 1
    %191 = vsyncpa [#allocation6], 1
    %192 = vsyncpa [#allocation4], 1

</llo_original>
